<compile_context>
chip_gen: v5e
topology: v5e:2x2
jax: 0.10.0
libtpu: 0.0.40
codegen_flags: <defaults>
</compile_context>

<pallas_src>
import jax
import jax.numpy as jnp
from jax.experimental import pallas as pl
from jax.experimental.pallas import tpu as pltpu

LANE = 128


def _round_up(n, m):
    return ((n + m - 1) // m) * m


def _mlp_kernel(x_ref, w1_ref, b1_ref, w2_ref, b2_ref, o_ref):
    # x arrives unpadded/un-cast (no per-call HBM pad round trip); the bf16
    # cast is a cheap VPU op on the VMEM tile.
    x = x_ref[...].astype(w1_ref.dtype)
    # First linear on the MXU, f32 accumulation.
    h = jnp.dot(x, w1_ref[...], preferred_element_type=jnp.float32)
    h = jnp.maximum(h + b1_ref[...], 0.0)                 # bias + ReLU (VPU, f32)
    # Second linear: activations back to bf16 for the MXU, f32 accumulation.
    y = jnp.dot(h.astype(w2_ref.dtype), w2_ref[...],
                preferred_element_type=jnp.float32)
    o_ref[...] = (y + b2_ref[...]).astype(o_ref.dtype)    # bf16 writeback


def prepare_mlp_params(w1, b1, w2, b2, compute_dtype=jnp.bfloat16):
    """One-time weight prep (NOT per forward): transpose to (in, out), zero-pad
    the *output* feature dims to lane multiples, cast to bf16.  K (=num_inputs)
    is left unpadded.
      w1: (num_features, num_inputs)  b1: (num_features,)
      w2: (num_outputs, num_features) b2: (num_outputs,)   -- nn.Linear layout.
    """
    d_hid, d_in = w1.shape
    d_out, _ = w2.shape
    d_hid_p = _round_up(d_hid, LANE)   # 256 -> 256
    d_out_p = _round_up(d_out, LANE)   # 10  -> 128

    w1_t = jnp.zeros((d_in, d_hid_p), compute_dtype)
    w1_t = w1_t.at[:, :d_hid].set(w1.T.astype(compute_dtype))
    w2_t = jnp.zeros((d_hid_p, d_out_p), compute_dtype)
    w2_t = w2_t.at[:d_hid, :d_out].set(w2.T.astype(compute_dtype))
    b1_p = jnp.zeros((1, d_hid_p), jnp.float32).at[:, :d_hid].set(b1.astype(jnp.float32))
    b2_p = jnp.zeros((1, d_out_p), jnp.float32).at[:, :d_out].set(b2.astype(jnp.float32))

    return dict(w1_t=w1_t, b1=b1_p, w2_t=w2_t, b2=b2_p,
                d_in=d_in, d_hid=d_hid, d_out=d_out,
                d_hid_p=d_hid_p, d_out_p=d_out_p,
                compute_dtype=compute_dtype)


def _num_tensorcores_per_chip():
    """v7x has 2 TensorCores/chip worth sharding a 'parallel' grid axis across;
    v5e/v6e have 1 (splitting there only adds per-step overhead)."""
    try:
        kind = jax.devices()[0].device_kind.lower()
    except Exception:
        return 1
    return 2 if "v7" in kind else 1


def _default_block_b(B, *, num_tc=1):
    """Batch tile size.
    - Whole batch in one block when it fits the cap (no extra ~0.35us grid
      steps, full MXU M-occupancy) — always preferred on single-TC v5e/v6e.
    - v7x only: split across the two TensorCores only when each core gets a
      substantial tile (B >= 512 -> >= 256 rows each), multiple of 16 so bf16
      vregs stay fully packed.
    - 1024-row cap keeps streamed x/out tiles comfortably inside the scoped
      VMEM budget on every generation (incl. v7x's 64 MiB physical VMEM).
    """
    cap = 1024
    if num_tc >= 2 and B >= 512:
        per_core = _round_up(pl.cdiv(B, num_tc), 16)
        return max(256, min(per_core, cap))
    return B if B <= cap else cap


def _derive_vmem_limit_bytes(block_b, d_in, d_hid_p, d_out_p, x_itemsize, n_x_buf):
    """Scoped-VMEM limit derived from the actual footprint (never a big
    hard-coded number: v7x only has 64 MiB physical VMEM vs 128 on v5e/v6e)."""
    weight_bytes = (d_in * d_hid_p + d_hid_p * d_out_p) * 2 + (d_hid_p + d_out_p) * 4
    stream_bytes = block_b * (d_in * x_itemsize + d_out_p * 2)   # x in + bf16 out
    scratch_bytes = block_b * (d_hid_p + d_out_p) * 4            # f32 intermediates
    total = 2 * weight_bytes + max(n_x_buf, 2) * stream_bytes + scratch_bytes
    return int(min(max(2 * total, 16 << 20), 48 << 20))          # 2x headroom, clamp


def mlp_forward(x, params, *, block_b=None):
    """x: (B, num_inputs) float.  Returns (B, num_outputs) in x.dtype.
    Compute is bf16 on the MXU with f32 accumulation -> logits deviate slightly
    from an all-f32 reference (well within ~1e-2 relative)."""
    B, d_in = x.shape
    assert d_in == params["d_in"], "input feature mismatch"
    d_hid_p, d_out_p, d_out = params["d_hid_p"], params["d_out_p"], params["d_out"]
    cdt = params["compute_dtype"]

    if block_b is None:
        block_b = _default_block_b(B, num_tc=_num_tensorcores_per_chip())
    block_b = min(block_b, B)
    n_steps = pl.cdiv(B, block_b)
    # NOTE: when B % block_b != 0 the last x block reads rows past the end of
    # x; rows are independent and only valid output rows are written back.

    # Triple-buffer the streamed x tile only when there are enough grid steps
    # to hide its DMA; for 1-3 step grids a third buffer just burns VMEM.
    if n_steps >= 4:
        x_spec = pl.BlockSpec((block_b, d_in), lambda i: (i, 0),
                              pipeline_mode=pl.Buffered(3))
        n_x_buf = 3
    else:
        x_spec = pl.BlockSpec((block_b, d_in), lambda i: (i, 0))
        n_x_buf = 2

    vmem_limit = _derive_vmem_limit_bytes(block_b, d_in, d_hid_p, d_out_p,
                                          x.dtype.itemsize, n_x_buf)

    out_p = pl.pallas_call(
        _mlp_kernel,
        # bf16 writeback halves output HBM traffic (lane-dense padded 128 cols).
        out_shape=jax.ShapeDtypeStruct((B, d_out_p), cdt),
        grid_spec=pltpu.PrefetchScalarGridSpec(
            num_scalar_prefetch=0,
            grid=(n_steps,),
            in_specs=[
                x_spec,                                              # x tile (streamed, unpadded K)
                pl.BlockSpec((d_in, d_hid_p), lambda i: (0, 0)),     # W1^T (VMEM-resident)
                pl.BlockSpec((1, d_hid_p), lambda i: (0, 0)),        # b1   (resident)
                pl.BlockSpec((d_hid_p, d_out_p), lambda i: (0, 0)),  # W2^T (resident)
                pl.BlockSpec((1, d_out_p), lambda i: (0, 0)),        # b2   (resident)
            ],
            out_specs=pl.BlockSpec((block_b, d_out_p), lambda i: (i, 0)),
        ),
        compiler_params=pltpu.CompilerParams(
            dimension_semantics=("parallel",),
            vmem_limit_bytes=vmem_limit,
        ),
    )(x, params["w1_t"], params["b1"], params["w2_t"], params["b2"])

    # Slice valid logits (reads the halved bf16 slab) and restore caller dtype.
    return out_p[:, :d_out].astype(x.dtype)


def _init_linear(key, out_features, in_features, dtype=jnp.float32):
    """Deterministic init mimicking nn.Linear default: U(-1/sqrt(fan_in), +1/sqrt(fan_in))."""
    kw, kb = jax.random.split(key)
    bound = 1.0 / jnp.sqrt(jnp.float32(in_features))
    w = jax.random.uniform(kw, (out_features, in_features), dtype,
                           minval=-bound, maxval=bound)
    b = jax.random.uniform(kb, (out_features,), dtype,
                           minval=-bound, maxval=bound)
    return w, b


def _reference(x, w1, b1, w2, b2):
    h = jnp.maximum(x @ w1.T + b1, 0.0)
    return h @ w2.T + b2


if __name__ == "__main__":
    # MNIST-style MLP: num_inputs=784, num_features=256, num_outputs=10.
    num_inputs, num_features, num_outputs = 784, 256, 10

    key = jax.random.PRNGKey(0)
    kx1, kx2, k1, k2 = jax.random.split(key, 4)
    w1, b1 = _init_linear(k1, num_features, num_inputs)
    w2, b2 = _init_linear(k2, num_outputs, num_features)

    # One-time weight prep (transpose / pad out-dims / bf16 cast), off hot path.
    params = prepare_mlp_params(w1, b1, w2, b2)

    # Case 1: small batch, single grid step (the common latency-bound regime).
    B1 = 32
    x1 = jax.random.normal(kx1, (B1, num_inputs), jnp.float32)
    out1 = jax.block_until_ready(mlp_forward(x1, params))
    ref1 = _reference(x1, w1, b1, w2, b2)
    assert out1.shape == (B1, num_outputs)
    assert jnp.allclose(out1, ref1, atol=5e-2, rtol=5e-2), "mismatch vs reference (case 1)"

    # Case 2: multi-step grid with a ragged last block (exercises the
    # Buffered(3) streaming path and masked edge writes).
    B2 = 200
    x2 = jax.random.normal(kx2, (B2, num_inputs), jnp.float32)
    out2 = jax.block_until_ready(mlp_forward(x2, params, block_b=64))
    ref2 = _reference(x2, w1, b1, w2, b2)
    assert out2.shape == (B2, num_outputs)
    assert jnp.allclose(out2, ref2, atol=5e-2, rtol=5e-2), "mismatch vs reference (case 2)"

    print("KERNEL_OK")
</pallas_src>

<mosaic_0001>
module attributes {stable_mosaic.version = 11 : i64} {
  func.func @_mlp_kernel(%arg0: i32, %arg1: memref<32x784xf32, #tpu.memory_space<vmem>>, %arg2: memref<784x256xbf16, #tpu.memory_space<vmem>>, %arg3: memref<1x256xf32, #tpu.memory_space<vmem>>, %arg4: memref<256x128xbf16, #tpu.memory_space<vmem>>, %arg5: memref<1x128xf32, #tpu.memory_space<vmem>>, %arg6: memref<32x128xbf16, #tpu.memory_space<vmem>>) attributes {dimension_semantics = [#tpu.dimension_semantics<parallel>], iteration_bounds = array<i64: 1>, scalar_prefetch = 0 : i64, scratch_operands = 0 : i64, tpu.core_type = #tpu.core_type<tc>, window_params = [{transform_indices = @transform_0, window_bounds = array<i64: 32, 784>}, {pipeline_mode = #tpu.pipeline_mode<synchronous>, transform_indices = @transform_1, window_bounds = array<i64: 784, 256>}, {pipeline_mode = #tpu.pipeline_mode<synchronous>, transform_indices = @transform_2, window_bounds = array<i64: 1, 256>}, {pipeline_mode = #tpu.pipeline_mode<synchronous>, transform_indices = @transform_3, window_bounds = array<i64: 256, 128>}, {pipeline_mode = #tpu.pipeline_mode<synchronous>, transform_indices = @transform_4, window_bounds = array<i64: 1, 128>}, {transform_indices = @transform_5, window_bounds = array<i64: 32, 128>}]} {
    %c0 = arith.constant 0 : index
    %c0_0 = arith.constant 0 : index
    %0 = vector.load %arg1[%c0, %c0_0] : memref<32x784xf32, #tpu.memory_space<vmem>>, vector<32x784xf32>
    %1 = arith.truncf %0 : vector<32x784xf32> to vector<32x784xbf16>
    %c0_1 = arith.constant 0 : index
    %c0_2 = arith.constant 0 : index
    %2 = vector.load %arg2[%c0_1, %c0_2] : memref<784x256xbf16, #tpu.memory_space<vmem>>, vector<784x256xbf16>
    %cst = arith.constant dense<0.000000e+00> : vector<32x256xf32>
    %3 = tpu.matmul %1, %2, %cst {dimension_numbers = #tpu.dot_dimension_numbers<[1], [0], [0], [1], [0, 0, 1, 1], [], []>} : vector<32x784xbf16>, vector<784x256xbf16>, vector<32x256xf32> -> vector<32x256xf32>
    %c0_3 = arith.constant 0 : index
    %c0_4 = arith.constant 0 : index
    %4 = vector.load %arg3[%c0_3, %c0_4] : memref<1x256xf32, #tpu.memory_space<vmem>>, vector<1x256xf32>
    %5 = vector.broadcast %4 : vector<1x256xf32> to vector<32x256xf32>
    %6 = arith.addf %3, %5 : vector<32x256xf32>
    %cst_5 = arith.constant 0.000000e+00 : f32
    %7 = vector.broadcast %cst_5 : f32 to vector<32x256xf32>
    %8 = arith.maximumf %6, %7 : vector<32x256xf32>
    %9 = arith.truncf %8 : vector<32x256xf32> to vector<32x256xbf16>
    %c0_6 = arith.constant 0 : index
    %c0_7 = arith.constant 0 : index
    %10 = vector.load %arg4[%c0_6, %c0_7] : memref<256x128xbf16, #tpu.memory_space<vmem>>, vector<256x128xbf16>
    %cst_8 = arith.constant dense<0.000000e+00> : vector<32x128xf32>
    %11 = tpu.matmul %9, %10, %cst_8 {dimension_numbers = #tpu.dot_dimension_numbers<[1], [0], [0], [1], [0, 0, 1, 1], [], []>} : vector<32x256xbf16>, vector<256x128xbf16>, vector<32x128xf32> -> vector<32x128xf32>
    %c0_9 = arith.constant 0 : index
    %c0_10 = arith.constant 0 : index
    %12 = vector.load %arg5[%c0_9, %c0_10] : memref<1x128xf32, #tpu.memory_space<vmem>>, vector<1x128xf32>
    %13 = vector.broadcast %12 : vector<1x128xf32> to vector<32x128xf32>
    %14 = arith.addf %11, %13 : vector<32x128xf32>
    %15 = arith.truncf %14 : vector<32x128xf32> to vector<32x128xbf16>
    %c0_11 = arith.constant 0 : index
    %c0_12 = arith.constant 0 : index
    %16 = vector.load %arg6[%c0_11, %c0_12] : memref<32x128xbf16, #tpu.memory_space<vmem>>, vector<32x128xbf16>
    tpu.vector_store %arg6[%c0_11, %c0_12], %15 {strides = array<i32>} : memref<32x128xbf16, #tpu.memory_space<vmem>>, vector<32x128xbf16>,
    return
  }
  func.func @transform_0(%arg0: i32) -> (i32, i32) {
    %c0_i32 = arith.constant 0 : i32
    %c0_i32_0 = arith.constant 0 : i32
    return %arg0, %c0_i32 : i32, i32
  }
  func.func @transform_1(%arg0: i32) -> (i32, i32) {
    %c0_i32 = arith.constant 0 : i32
    %c0_i32_0 = arith.constant 0 : i32
    %c0_i32_1 = arith.constant 0 : i32
    return %c0_i32, %c0_i32_0 : i32, i32
  }
  func.func @transform_2(%arg0: i32) -> (i32, i32) {
    %c0_i32 = arith.constant 0 : i32
    %c0_i32_0 = arith.constant 0 : i32
    %c0_i32_1 = arith.constant 0 : i32
    return %c0_i32, %c0_i32_0 : i32, i32
  }
  func.func @transform_3(%arg0: i32) -> (i32, i32) {
    %c0_i32 = arith.constant 0 : i32
    %c0_i32_0 = arith.constant 0 : i32
    %c0_i32_1 = arith.constant 0 : i32
    return %c0_i32, %c0_i32_0 : i32, i32
  }
  func.func @transform_4(%arg0: i32) -> (i32, i32) {
    %c0_i32 = arith.constant 0 : i32
    %c0_i32_0 = arith.constant 0 : i32
    %c0_i32_1 = arith.constant 0 : i32
    return %c0_i32, %c0_i32_0 : i32, i32
  }
  func.func @transform_5(%arg0: i32) -> (i32, i32) {
    %c0_i32 = arith.constant 0 : i32
    %c0_i32_0 = arith.constant 0 : i32
    return %arg0, %c0_i32 : i32, i32
  }
}

</mosaic_0001>

<llo_original>
// kernel: tpu_custom_call.1
$region0: #{tpu_custom_call.1}
  #allocation0 [shape = 'u32[]', space=smem, size = 0x4, offset = 0x4, fixed_abs, tag = 'smem constant byte address 0x4 - core index']
  #allocation1 [shape = 'u32[72,128]{1,0:T(1,128)}', space=vmem, size = 0x9000, scoped, tag = 'internal scratch']
  %s0 = inlined_call_operand.hbm [shape: f32[32,784], index: 0, kind: input, shape index: {}]
  %s1 = inlined_call_operand.hbm [shape: bf16[784,256], index: 1, kind: input, shape index: {}]
  %s2 = inlined_call_operand.hbm [shape: f32[1,256], index: 2, kind: input, shape index: {}]
  %s3 = inlined_call_operand.hbm [shape: bf16[256,128], index: 3, kind: input, shape index: {}]
  %s4 = inlined_call_operand.vmem [shape: f32[1,128], index: 4, kind: input, shape index: {}]
  %s5 = inlined_call_operand.hbm [shape: bf16[32,128], index: 5, kind: output, shape index: {}]
  %s6 = sld [smem:[#allocation0]]
  $region46: #{tpu_custom_call.1} parent=0
    _
  %s8 = ssub.s32 1, %s6
  %s9 = scalar_select 0, %s8, %s6
  $region1: #{tpu_custom_call.1} parent=0
    #allocation2 [shape = 'u8[114688]{0}', space=vmem, size = 0x1c000, scoped, tag = 'input window, operand 0, single buffered']
    #allocation3 [shape = 's32[1]{0}', space=sflag, size = 0x4, scoped, tag = 'scoped memory for tpu_custom_call.1']
    #allocation4 [shape = 's32[1]{0}', space=sflag, size = 0x4, scoped, tag = 'scoped memory for tpu_custom_call.1']
    #allocation5 [shape = 'u8[401408]{0}', space=vmem, size = 0x62000, scoped, tag = 'input window, operand 1, single buffered']
    #allocation6 [shape = 's32[1]{0}', space=sflag, size = 0x4, scoped, tag = 'scoped memory for tpu_custom_call.1']
    #allocation7 [shape = 'u8[1024]{0}', space=vmem, size = 0x400, scoped, tag = 'input window, operand 2, single buffered']
    #allocation8 [shape = 'u8[65536]{0}', space=vmem, size = 0x10000, scoped, tag = 'input window, operand 3, single buffered']
    #allocation9 [shape = 's32[1]{0}', space=sflag, size = 0x4, scoped, tag = 'scoped memory for tpu_custom_call.1']
    #allocation10 [shape = 'u8[8192]{0}', space=vmem, size = 0x2000, scoped, tag = 'output window, operand 0, single buffered']
    %10 = vsyncpa [#allocation3], 0
    %11 = vsyncpa [#allocation6], 0
    %12 = vsyncpa [#allocation9], 0
    %13 = vsyncpa [#allocation4], 0
    // Predicated region
    $region2: #{tpu_custom_call.1} parent=1 // pred_check
      _
    $region3: #{tpu_custom_call.1} parent=1 // pred_check_branch
      %15 = sbr.rel (0) target = $region5
    $region4: #{tpu_custom_call.1} parent=1 // pred_region
      %17 = vsyncadd [#allocation3], 0
      %s18 = sshll.u32 %s0, 4
      %s19 = int_to_ptr.hbm [resolvable:$true] %s18
      %s20 = sshll.u32 [#allocation2], 4
      %s21 = int_to_ptr.vmem [resolvable:$true] %s20
      %26 = dma.hbm_to_vmem [thread:$0]  %s19, 3584, %s21, [#allocation3], 896, 896, 56
    $region5: #{tpu_custom_call.1} parent=1 // pred_fallthru
      _
    // Predicated region
    $region6: #{tpu_custom_call.1} parent=1 // pred_check
      _
    $region7: #{tpu_custom_call.1} parent=1 // pred_check_branch
      %28 = sbr.rel (0) target = $region9
    $region8: #{tpu_custom_call.1} parent=1 // pred_region
      %30 = vsyncadd [#allocation6], 0
      %s31 = sshll.u32 %s1, 4
      %s32 = int_to_ptr.hbm [resolvable:$true] %s31
      %s33 = sshll.u32 [#allocation5], 4
      %s34 = int_to_ptr.vmem [resolvable:$true] %s33
      %39 = dma.hbm_to_vmem [thread:$0]  %s32, 12544, %s34, [#allocation6], 128, 128, 8
    $region9: #{tpu_custom_call.1} parent=1 // pred_fallthru
      _
    // Predicated region
    $region10: #{tpu_custom_call.1} parent=1 // pred_check
      _
    $region11: #{tpu_custom_call.1} parent=1 // pred_check_branch
      %41 = sbr.rel (0) target = $region13
    $region12: #{tpu_custom_call.1} parent=1 // pred_region
      %43 = vsyncadd [#allocation6], 0
      %s45 = sshll.u32 %s2, 4
      %s46 = int_to_ptr.hbm [resolvable:$true] %s45
      %s47 = sshll.u32 [#allocation7], 4
      %s48 = int_to_ptr.vmem [resolvable:$true] %s47
      %50 = dma.hbm_to_vmem [thread:$0]  %s46, 32, %s48, [#allocation6]
    $region13: #{tpu_custom_call.1} parent=1 // pred_fallthru
      _
    // Predicated region
    $region14: #{tpu_custom_call.1} parent=1 // pred_check
      _
    $region15: #{tpu_custom_call.1} parent=1 // pred_check_branch
      %52 = sbr.rel (0) target = $region17
    $region16: #{tpu_custom_call.1} parent=1 // pred_region
      %54 = vsyncadd [#allocation9], 0
      %s55 = sshll.u32 %s3, 4
      %s56 = int_to_ptr.hbm [resolvable:$true] %s55
      %s57 = sshll.u32 [#allocation8], 4
      %s58 = int_to_ptr.vmem [resolvable:$true] %s57
      %63 = dma.hbm_to_vmem [thread:$0]  %s56, 2048, %s58, [#allocation9], 64, 64, 4
    $region17: #{tpu_custom_call.1} parent=1 // pred_fallthru
      _
    // Predicated region
    $region18: #{tpu_custom_call.1} parent=1 // pred_check
      _
    $region19: #{tpu_custom_call.1} parent=1 // pred_check_branch
      %65 = sbr.rel (0) target = $region21
    $region20: #{tpu_custom_call.1} parent=1 // pred_region
      _
    $region21: #{tpu_custom_call.1} parent=1 // pred_fallthru
      _
    // Predicated region
    $region22: #{tpu_custom_call.1} parent=1 // pred_check
      _
    $region23: #{tpu_custom_call.1} parent=1 // pred_check_branch
      %67 = sbr.rel (0) target = $region25
    $region24: #{tpu_custom_call.1} parent=1 // pred_region
      %69 = dma.done [#allocation3], 3584
    $region25: #{tpu_custom_call.1} parent=1 // pred_fallthru
      _
    // Predicated region
    $region26: #{tpu_custom_call.1} parent=1 // pred_check
      _
    $region27: #{tpu_custom_call.1} parent=1 // pred_check_branch
      %71 = sbr.rel (0) target = $region29
    $region28: #{tpu_custom_call.1} parent=1 // pred_region
      %73 = dma.done [#allocation6], 12544
    $region29: #{tpu_custom_call.1} parent=1 // pred_fallthru
      _
    // Predicated region
    $region30: #{tpu_custom_call.1} parent=1 // pred_check
      _
    $region31: #{tpu_custom_call.1} parent=1 // pred_check_branch
      %75 = sbr.rel (0) target = $region33
    $region32: #{tpu_custom_call.1} parent=1 // pred_region
      %77 = dma.done [#allocation6], 32
    $region33: #{tpu_custom_call.1} parent=1 // pred_fallthru
      _
    // Predicated region
    $region34: #{tpu_custom_call.1} parent=1 // pred_check
      _
    $region35: #{tpu_custom_call.1} parent=1 // pred_check_branch
      %79 = sbr.rel (0) target = $region37
    $region36: #{tpu_custom_call.1} parent=1 // pred_region
      %81 = dma.done [#allocation9], 2048
    $region37: #{tpu_custom_call.1} parent=1 // pred_fallthru
      _
    %v83 = vld [vmem:[#allocation2] sm:$0xff]
    %v84 = vld [vmem:[#allocation2 + $0x8] sm:$0xff]
    %v85 = vld [vmem:[#allocation2 + $0x10] sm:$0xff]
    %v86 = vld [vmem:[#allocation2 + $0x18] sm:$0xff]
    %v87 = vld [vmem:[#allocation2 + $0x20] sm:$0xff]
    %v88 = vld [vmem:[#allocation2 + $0x28] sm:$0xff]
    %v89 = vld [vmem:[#allocation2 + $0x30] sm:$0xff]
    %v90 = vld [vmem:[#allocation2 + $0x38] sm:$0xff]
    %v91 = vld [vmem:[#allocation2 + $0x40] sm:$0xff]
    %v92 = vld [vmem:[#allocation2 + $0x48] sm:$0xff]
    %v93 = vld [vmem:[#allocation2 + $0x50] sm:$0xff]
    %v94 = vld [vmem:[#allocation2 + $0x58] sm:$0xff]
    %v95 = vld [vmem:[#allocation2 + $0x60] sm:$0xff]
    %v96 = vld [vmem:[#allocation2 + $0x68] sm:$0xff]
    %v97 = vld [vmem:[#allocation2 + $0x70] sm:$0xff]
    %v98 = vld [vmem:[#allocation2 + $0x78] sm:$0xff]
    %v99 = vld [vmem:[#allocation2 + $0x80] sm:$0xff]
    %v100 = vld [vmem:[#allocation2 + $0x88] sm:$0xff]
    %v101 = vld [vmem:[#allocation2 + $0x90] sm:$0xff]
    %v102 = vld [vmem:[#allocation2 + $0x98] sm:$0xff]
    %v103 = vld [vmem:[#allocation2 + $0xa0] sm:$0xff]
    %v104 = vld [vmem:[#allocation2 + $0xa8] sm:$0xff]
    %v105 = vld [vmem:[#allocation2 + $0xb0] sm:$0xff]
    %v106 = vld [vmem:[#allocation2 + $0xb8] sm:$0xff]
    %v107 = vld [vmem:[#allocation2 + $0xc0] sm:$0xff]
    %v108 = vld [vmem:[#allocation2 + $0xc8] sm:$0xff]
    %v109 = vld [vmem:[#allocation2 + $0xd0] sm:$0xff]
    %v110 = vld [vmem:[#allocation2 + $0xd8] sm:$0xff]
    %v111 = vpack.c.bf16 %v90, %v83
    %v112 = vpack.c.bf16 %v91, %v84
    %v113 = vpack.c.bf16 %v92, %v85
    %v114 = vpack.c.bf16 %v93, %v86
    %v115 = vpack.c.bf16 %v94, %v87
    %v116 = vpack.c.bf16 %v95, %v88
    %v117 = vpack.c.bf16 %v96, %v89
    %v118 = vpack.c.bf16 %v104, %v97
    %v119 = vpack.c.bf16 %v105, %v98
    %v120 = vpack.c.bf16 %v106, %v99
    %v121 = vpack.c.bf16 %v107, %v100
    %v122 = vpack.c.bf16 %v108, %v101
    %v123 = vpack.c.bf16 %v109, %v102
    %v124 = vpack.c.bf16 %v110, %v103
    %v125 = vld [vmem:[#allocation5] sm:$0xff]
    %v126 = vld [vmem:[#allocation5 + $0x8] sm:$0xff]
    %v127 = vld [vmem:[#allocation5 + $0x10] sm:$0xff]
    %v128 = vld [vmem:[#allocation5 + $0x18] sm:$0xff]
    %v129 = vld [vmem:[#allocation5 + $0x20] sm:$0xff]
    %v130 = vld [vmem:[#allocation5 + $0x28] sm:$0xff]
    %v131 = vld [vmem:[#allocation5 + $0x30] sm:$0xff]
    %v132 = vld [vmem:[#allocation5 + $0x38] sm:$0xff]
    %v133 = vld [vmem:[#allocation5 + $0x40] sm:$0xff]
    %v134 = vld [vmem:[#allocation5 + $0x48] sm:$0xff]
    %v135 = vld [vmem:[#allocation5 + $0x50] sm:$0xff]
    %v136 = vld [vmem:[#allocation5 + $0x58] sm:$0xff]
    %v137 = vld [vmem:[#allocation5 + $0x60] sm:$0xff]
    %v138 = vld [vmem:[#allocation5 + $0x68] sm:$0xff]
    %v139 = vld [vmem:[#allocation5 + $0x70] sm:$0xff]
    %v140 = vld [vmem:[#allocation5 + $0x78] sm:$0xff]
    %v141 = vld [vmem:[#allocation5 + $0x80] sm:$0xff]
    %v142 = vld [vmem:[#allocation5 + $0x88] sm:$0xff]
    %v143 = vld [vmem:[#allocation5 + $0x90] sm:$0xff]
    %v144 = vld [vmem:[#allocation5 + $0x98] sm:$0xff]
    %v145 = vld [vmem:[#allocation5 + $0xa0] sm:$0xff]
    %v146 = vld [vmem:[#allocation5 + $0xa8] sm:$0xff]
    %v147 = vld [vmem:[#allocation5 + $0xb0] sm:$0xff]
    %v148 = vld [vmem:[#allocation5 + $0xb8] sm:$0xff]
    %v149 = vld [vmem:[#allocation5 + $0xc0] sm:$0xff]
    %v150 = vld [vmem:[#allocation5 + $0xc8] sm:$0xff]
    %v151 = vld [vmem:[#allocation5 + $0xd0] sm:$0xff]
    %v152 = vld [vmem:[#allocation5 + $0xd8] sm:$0xff]
    %v153 = vld [vmem:[#allocation5 + $0xe0] sm:$0xff]
    %v154 = vld [vmem:[#allocation5 + $0xe8] sm:$0xff]
    %v155 = vld [vmem:[#allocation5 + $0xf0] sm:$0xff]
    %v156 = vld [vmem:[#allocation5 + $0xf8] sm:$0xff]
    %v157 = vld [vmem:[#allocation5 + $0x100] sm:$0xff]
    %v158 = vld [vmem:[#allocation5 + $0x108] sm:$0xff]
    %v159 = vld [vmem:[#allocation5 + $0x110] sm:$0xff]
    %v160 = vld [vmem:[#allocation5 + $0x118] sm:$0xff]
    %v161 = vld [vmem:[#allocation5 + $0x120] sm:$0xff]
    %v162 = vld [vmem:[#allocation5 + $0x128] sm:$0xff]
    %v163 = vld [vmem:[#allocation5 + $0x130] sm:$0xff]
    %v164 = vld [vmem:[#allocation5 + $0x138] sm:$0xff]
    %v165 = vld [vmem:[#allocation5 + $0x140] sm:$0xff]
    %v166 = vld [vmem:[#allocation5 + $0x148] sm:$0xff]
    %v167 = vld [vmem:[#allocation5 + $0x150] sm:$0xff]
    %v168 = vld [vmem:[#allocation5 + $0x158] sm:$0xff]
    %v169 = vld [vmem:[#allocation5 + $0x160] sm:$0xff]
    %v170 = vld [vmem:[#allocation5 + $0x168] sm:$0xff]
    %v171 = vld [vmem:[#allocation5 + $0x170] sm:$0xff]
    %v172 = vld [vmem:[#allocation5 + $0x178] sm:$0xff]
    %v173 = vld [vmem:[#allocation5 + $0x180] sm:$0xff]
    %v174 = vld [vmem:[#allocation5 + $0x188] sm:$0xff]
    %v175 = vld [vmem:[#allocation5 + $0x190] sm:$0xff]
    %v176 = vld [vmem:[#allocation5 + $0x198] sm:$0xff]
    %v177 = vld [vmem:[#allocation5 + $0x1a0] sm:$0xff]
    %v178 = vld [vmem:[#allocation5 + $0x1a8] sm:$0xff]
    %v179 = vld [vmem:[#allocation5 + $0x1b0] sm:$0xff]
    %v180 = vld [vmem:[#allocation5 + $0x1b8] sm:$0xff]
    %v181 = vld [vmem:[#allocation5 + $0x1c0] sm:$0xff]
    %v182 = vld [vmem:[#allocation5 + $0x1c8] sm:$0xff]
    %v183 = vld [vmem:[#allocation5 + $0x1d0] sm:$0xff]
    %v184 = vld [vmem:[#allocation5 + $0x1d8] sm:$0xff]
    %v185 = vld [vmem:[#allocation5 + $0x1e0] sm:$0xff]
    %v186 = vld [vmem:[#allocation5 + $0x1e8] sm:$0xff]
    %v187 = vld [vmem:[#allocation5 + $0x1f0] sm:$0xff]
    %v188 = vld [vmem:[#allocation5 + $0x1f8] sm:$0xff]
    %v189 = vld [vmem:[#allocation5 + $0x200] sm:$0xff]
    %v190 = vld [vmem:[#allocation5 + $0x208] sm:$0xff]
    %v191 = vld [vmem:[#allocation5 + $0x210] sm:$0xff]
    %v192 = vld [vmem:[#allocation5 + $0x218] sm:$0xff]
    %v193 = vld [vmem:[#allocation5 + $0x220] sm:$0xff]
    %v194 = vld [vmem:[#allocation5 + $0x228] sm:$0xff]
    %v195 = vld [vmem:[#allocation5 + $0x230] sm:$0xff]
    %v196 = vld [vmem:[#allocation5 + $0x238] sm:$0xff]
    %v197 = vld [vmem:[#allocation5 + $0x240] sm:$0xff]
    %v198 = vld [vmem:[#allocation5 + $0x248] sm:$0xff]
    %v199 = vld [vmem:[#allocation5 + $0x250] sm:$0xff]
    %v200 = vld [vmem:[#allocation5 + $0x258] sm:$0xff]
    %v201 = vld [vmem:[#allocation5 + $0x260] sm:$0xff]
    %v202 = vld [vmem:[#allocation5 + $0x268] sm:$0xff]
    %v203 = vld [vmem:[#allocation5 + $0x270] sm:$0xff]
    %v204 = vld [vmem:[#allocation5 + $0x278] sm:$0xff]
    %v205 = vld [vmem:[#allocation5 + $0x280] sm:$0xff]
    %v206 = vld [vmem:[#allocation5 + $0x288] sm:$0xff]
    %v207 = vld [vmem:[#allocation5 + $0x290] sm:$0xff]
    %v208 = vld [vmem:[#allocation5 + $0x298] sm:$0xff]
    %v209 = vld [vmem:[#allocation5 + $0x2a0] sm:$0xff]
    %v210 = vld [vmem:[#allocation5 + $0x2a8] sm:$0xff]
    %v211 = vld [vmem:[#allocation5 + $0x2b0] sm:$0xff]
    %v212 = vld [vmem:[#allocation5 + $0x2b8] sm:$0xff]
    %v213 = vld [vmem:[#allocation5 + $0x2c0] sm:$0xff]
    %v214 = vld [vmem:[#allocation5 + $0x2c8] sm:$0xff]
    %v215 = vld [vmem:[#allocation5 + $0x2d0] sm:$0xff]
    %v216 = vld [vmem:[#allocation5 + $0x2d8] sm:$0xff]
    %v217 = vld [vmem:[#allocation5 + $0x2e0] sm:$0xff]
    %v218 = vld [vmem:[#allocation5 + $0x2e8] sm:$0xff]
    %v219 = vld [vmem:[#allocation5 + $0x2f0] sm:$0xff]
    %v220 = vld [vmem:[#allocation5 + $0x2f8] sm:$0xff]
    %v221 = vld [vmem:[#allocation5 + $0x300] sm:$0xff]
    %v222 = vld [vmem:[#allocation5 + $0x308] sm:$0xff]
    %v223 = vld [vmem:[#allocation7] sm:$0x3]
    %v225 = vperm.slane %v223, 0
    %v226 = vperm.slane %v223, 1
    %v327 = vunpack.c.l.b16 %v125
    %v328 = vunpack.c.h.b16 %v125
    %v329 = vunpack.c.l.b16 %v126
    %v330 = vunpack.c.h.b16 %v126
    %v331 = vunpack.c.l.b16 %v127
    %v332 = vunpack.c.h.b16 %v127
    %v333 = vunpack.c.l.b16 %v128
    %v334 = vunpack.c.h.b16 %v128
    %v335 = vunpack.c.l.b16 %v129
    %v336 = vunpack.c.h.b16 %v129
    %v337 = vunpack.c.l.b16 %v130
    %v338 = vunpack.c.h.b16 %v130
    %v339 = vunpack.c.l.b16 %v131
    %v340 = vunpack.c.h.b16 %v131
    %v341 = vunpack.c.l.b16 %v132
    %v342 = vunpack.c.h.b16 %v132
    %v343 = vunpack.c.l.b16 %v133
    %v344 = vunpack.c.h.b16 %v133
    %v345 = vunpack.c.l.b16 %v134
    %v346 = vunpack.c.h.b16 %v134
    %v347 = vunpack.c.l.b16 %v135
    %v348 = vunpack.c.h.b16 %v135
    %v349 = vunpack.c.l.b16 %v136
    %v350 = vunpack.c.h.b16 %v136
    %v351 = vunpack.c.l.b16 %v137
    %v352 = vunpack.c.h.b16 %v137
    %v353 = vunpack.c.l.b16 %v138
    %v354 = vunpack.c.h.b16 %v138
    %v355 = vunpack.c.l.b16 %v139
    %v356 = vunpack.c.h.b16 %v139
    %v357 = vunpack.c.l.b16 %v140
    %v358 = vunpack.c.h.b16 %v140
    %v359 = vunpack.c.l.b16 %v141
    %v360 = vunpack.c.h.b16 %v141
    %v361 = vunpack.c.l.b16 %v142
    %v362 = vunpack.c.h.b16 %v142
    %v363 = vunpack.c.l.b16 %v143
    %v364 = vunpack.c.h.b16 %v143
    %v365 = vunpack.c.l.b16 %v144
    %v366 = vunpack.c.h.b16 %v144
    %v367 = vunpack.c.l.b16 %v145
    %v368 = vunpack.c.h.b16 %v145
    %v369 = vunpack.c.l.b16 %v146
    %v370 = vunpack.c.h.b16 %v146
    %v371 = vunpack.c.l.b16 %v147
    %v372 = vunpack.c.h.b16 %v147
    %v373 = vunpack.c.l.b16 %v148
    %v374 = vunpack.c.h.b16 %v148
    %v375 = vunpack.c.l.b16 %v149
    %v376 = vunpack.c.h.b16 %v149
    %v377 = vunpack.c.l.b16 %v150
    %v378 = vunpack.c.h.b16 %v150
    %v379 = vunpack.c.l.b16 %v151
    %v380 = vunpack.c.h.b16 %v151
    %v381 = vunpack.c.l.b16 %v152
    %v382 = vunpack.c.h.b16 %v152
    %v383 = vunpack.c.l.b16 %v153
    %v384 = vunpack.c.h.b16 %v153
    %v385 = vunpack.c.l.b16 %v154
    %v386 = vunpack.c.h.b16 %v154
    %v387 = vunpack.c.l.b16 %v155
    %v388 = vunpack.c.h.b16 %v155
    %v389 = vunpack.c.l.b16 %v156
    %v390 = vunpack.c.h.b16 %v156
    %v391 = vunpack.c.l.b16 %v157
    %v392 = vunpack.c.h.b16 %v157
    %v393 = vunpack.c.l.b16 %v158
    %v394 = vunpack.c.h.b16 %v158
    %v395 = vunpack.c.l.b16 %v159
    %v396 = vunpack.c.h.b16 %v159
    %v397 = vunpack.c.l.b16 %v160
    %v398 = vunpack.c.h.b16 %v160
    %v399 = vunpack.c.l.b16 %v161
    %v400 = vunpack.c.h.b16 %v161
    %v401 = vunpack.c.l.b16 %v162
    %v402 = vunpack.c.h.b16 %v162
    %v403 = vunpack.c.l.b16 %v163
    %v404 = vunpack.c.h.b16 %v163
    %v405 = vunpack.c.l.b16 %v164
    %v406 = vunpack.c.h.b16 %v164
    %v407 = vunpack.c.l.b16 %v165
    %v408 = vunpack.c.h.b16 %v165
    %v409 = vunpack.c.l.b16 %v166
    %v410 = vunpack.c.h.b16 %v166
    %v411 = vunpack.c.l.b16 %v167
    %v412 = vunpack.c.h.b16 %v167
    %v413 = vunpack.c.l.b16 %v168
    %v414 = vunpack.c.h.b16 %v168
    %v415 = vunpack.c.l.b16 %v169
    %v416 = vunpack.c.h.b16 %v169
    %v417 = vunpack.c.l.b16 %v170
    %v418 = vunpack.c.h.b16 %v170
    %v419 = vunpack.c.l.b16 %v171
    %v420 = vunpack.c.h.b16 %v171
    %v421 = vunpack.c.l.b16 %v172
    %v422 = vunpack.c.h.b16 %v172
    %v423 = vunpack.c.l.b16 %v173
    %v424 = vunpack.c.h.b16 %v173
    %v425 = vunpack.c.l.b16 %v174
    %v426 = vunpack.c.h.b16 %v174
    %v427 = vunpack.c.l.b16 %v175
    %v428 = vunpack.c.h.b16 %v175
    %v429 = vunpack.c.l.b16 %v176
    %v430 = vunpack.c.h.b16 %v176
    %v431 = vunpack.c.l.b16 %v177
    %v432 = vunpack.c.h.b16 %v177
    %v433 = vunpack.c.l.b16 %v178
    %v434 = vunpack.c.h.b16 %v178
    %v435 = vunpack.c.l.b16 %v179
    %v436 = vunpack.c.h.b16 %v179
    %v437 = vunpack.c.l.b16 %v180
    %v438 = vunpack.c.h.b16 %v180
    %v439 = vunpack.c.l.b16 %v181
    %v440 = vunpack.c.h.b16 %v181
    %v441 = vunpack.c.l.b16 %v182
    %v442 = vunpack.c.h.b16 %v182
    %v443 = vunpack.c.l.b16 %v183
    %v444 = vunpack.c.h.b16 %v183
    %v445 = vunpack.c.l.b16 %v184
    %v446 = vunpack.c.h.b16 %v184
    %v447 = vunpack.c.l.b16 %v185
    %v448 = vunpack.c.h.b16 %v185
    %v449 = vunpack.c.l.b16 %v186
    %v450 = vunpack.c.h.b16 %v186
    %v451 = vunpack.c.l.b16 %v187
    %v452 = vunpack.c.h.b16 %v187
    %v453 = vunpack.c.l.b16 %v188
    %v454 = vunpack.c.h.b16 %v188
    %v455 = vunpack.c.l.b16 %v189
    %v456 = vunpack.c.h.b16 %v189
    %v457 = vunpack.c.l.b16 %v190
    %v458 = vunpack.c.h.b16 %v190
    %v459 = vunpack.c.l.b16 %v191
    %v460 = vunpack.c.h.b16 %v191
    %v461 = vunpack.c.l.b16 %v192
    %v462 = vunpack.c.h.b16 %v192
    %v463 = vunpack.c.l.b16 %v193
    %v464 = vunpack.c.h.b16 %v193
    %v465 = vunpack.c.l.b16 %v194
    %v466 = vunpack.c.h.b16 %v194
    %v467 = vunpack.c.l.b16 %v195
    %v468 = vunpack.c.h.b16 %v195
    %v469 = vunpack.c.l.b16 %v196
    %v470 = vunpack.c.h.b16 %v196
    %v471 = vunpack.c.l.b16 %v197
    %v472 = vunpack.c.h.b16 %v197
    %v473 = vunpack.c.l.b16 %v198
    %v474 = vunpack.c.h.b16 %v198
    %v475 = vunpack.c.l.b16 %v199
    %v476 = vunpack.c.h.b16 %v199
    %v477 = vunpack.c.l.b16 %v200
    %v478 = vunpack.c.h.b16 %v200
    %v479 = vunpack.c.l.b16 %v201
    %v480 = vunpack.c.h.b16 %v201
    %v481 = vunpack.c.l.b16 %v202
    %v482 = vunpack.c.h.b16 %v202
    %v483 = vunpack.c.l.b16 %v203
    %v484 = vunpack.c.h.b16 %v203
    %v485 = vunpack.c.l.b16 %v204
    %v486 = vunpack.c.h.b16 %v204
    %v487 = vunpack.c.l.b16 %v205
    %v488 = vunpack.c.h.b16 %v205
    %v489 = vunpack.c.l.b16 %v206
    %v490 = vunpack.c.h.b16 %v206
    %v491 = vunpack.c.l.b16 %v207
    %v492 = vunpack.c.h.b16 %v207
    %v493 = vunpack.c.l.b16 %v208
    %v494 = vunpack.c.h.b16 %v208
    %v495 = vunpack.c.l.b16 %v209
    %v496 = vunpack.c.h.b16 %v209
    %v497 = vunpack.c.l.b16 %v210
    %v498 = vunpack.c.h.b16 %v210
    %v499 = vunpack.c.l.b16 %v211
    %v500 = vunpack.c.h.b16 %v211
    %v501 = vunpack.c.l.b16 %v212
    %v502 = vunpack.c.h.b16 %v212
    %v503 = vunpack.c.l.b16 %v213
    %v504 = vunpack.c.h.b16 %v213
    %v505 = vunpack.c.l.b16 %v214
    %v506 = vunpack.c.h.b16 %v214
    %v507 = vunpack.c.l.b16 %v215
    %v508 = vunpack.c.h.b16 %v215
    %v509 = vunpack.c.l.b16 %v216
    %v510 = vunpack.c.h.b16 %v216
    %v511 = vunpack.c.l.b16 %v217
    %v512 = vunpack.c.h.b16 %v217
    %v513 = vunpack.c.l.b16 %v218
    %v514 = vunpack.c.h.b16 %v218
    %v515 = vunpack.c.l.b16 %v219
    %v516 = vunpack.c.h.b16 %v219
    %v517 = vunpack.c.l.b16 %v220
    %v518 = vunpack.c.h.b16 %v220
    %v519 = vunpack.c.l.b16 %v221
    %v520 = vunpack.c.h.b16 %v221
    %v521 = vunpack.c.l.b16 %v222
    %v522 = vunpack.c.h.b16 %v222
    %v523 = vpack.c.b16 %v329, %v327
    %v524 = vpack.c.b16 %v330, %v328
    %v525 = vpack.c.b16 %v333, %v331
    %v526 = vpack.c.b16 %v334, %v332
    %v527 = vpack.c.b16 %v337, %v335
    %v528 = vpack.c.b16 %v338, %v336
    %v529 = vpack.c.b16 %v341, %v339
    %v530 = vpack.c.b16 %v342, %v340
    %v531 = vpack.c.b16 %v345, %v343
    %v532 = vpack.c.b16 %v346, %v344
    %v533 = vpack.c.b16 %v349, %v347
    %v534 = vpack.c.b16 %v350, %v348
    %v535 = vpack.c.b16 %v353, %v351
    %v536 = vpack.c.b16 %v354, %v352
    %v537 = vpack.c.b16 %v357, %v355
    %v538 = vpack.c.b16 %v358, %v356
    %v539 = vpack.c.b16 %v361, %v359
    %v540 = vpack.c.b16 %v362, %v360
    %v541 = vpack.c.b16 %v365, %v363
    %v542 = vpack.c.b16 %v366, %v364
    %v543 = vpack.c.b16 %v369, %v367
    %v544 = vpack.c.b16 %v370, %v368
    %v545 = vpack.c.b16 %v373, %v371
    %v546 = vpack.c.b16 %v374, %v372
    %v547 = vpack.c.b16 %v377, %v375
    %v548 = vpack.c.b16 %v378, %v376
    %v549 = vpack.c.b16 %v381, %v379
    %v550 = vpack.c.b16 %v382, %v380
    %v551 = vpack.c.b16 %v385, %v383
    %v552 = vpack.c.b16 %v386, %v384
    %v553 = vpack.c.b16 %v389, %v387
    %v554 = vpack.c.b16 %v390, %v388
    %v555 = vpack.c.b16 %v393, %v391
    %v556 = vpack.c.b16 %v394, %v392
    %v557 = vpack.c.b16 %v397, %v395
    %v558 = vpack.c.b16 %v398, %v396
    %v559 = vpack.c.b16 %v401, %v399
    %v560 = vpack.c.b16 %v402, %v400
    %v561 = vpack.c.b16 %v405, %v403
    %v562 = vpack.c.b16 %v406, %v404
    %v563 = vpack.c.b16 %v409, %v407
    %v564 = vpack.c.b16 %v410, %v408
    %v565 = vpack.c.b16 %v413, %v411
    %v566 = vpack.c.b16 %v414, %v412
    %v567 = vpack.c.b16 %v417, %v415
    %v568 = vpack.c.b16 %v418, %v416
    %v569 = vpack.c.b16 %v421, %v419
    %v570 = vpack.c.b16 %v422, %v420
    %v571 = vpack.c.b16 %v425, %v423
    %v572 = vpack.c.b16 %v426, %v424
    %v573 = vpack.c.b16 %v429, %v427
    %v574 = vpack.c.b16 %v430, %v428
    %v575 = vpack.c.b16 %v433, %v431
    %v576 = vpack.c.b16 %v434, %v432
    %v577 = vpack.c.b16 %v437, %v435
    %v578 = vpack.c.b16 %v438, %v436
    %v579 = vpack.c.b16 %v441, %v439
    %v580 = vpack.c.b16 %v442, %v440
    %v581 = vpack.c.b16 %v445, %v443
    %v582 = vpack.c.b16 %v446, %v444
    %v583 = vpack.c.b16 %v449, %v447
    %v584 = vpack.c.b16 %v450, %v448
    %v585 = vpack.c.b16 %v453, %v451
    %v586 = vpack.c.b16 %v454, %v452
    %v587 = vpack.c.b16 %v457, %v455
    %v588 = vpack.c.b16 %v458, %v456
    %v589 = vpack.c.b16 %v461, %v459
    %v590 = vpack.c.b16 %v462, %v460
    %v591 = vpack.c.b16 %v465, %v463
    %v592 = vpack.c.b16 %v466, %v464
    %v593 = vpack.c.b16 %v469, %v467
    %v594 = vpack.c.b16 %v470, %v468
    %v595 = vpack.c.b16 %v473, %v471
    %v596 = vpack.c.b16 %v474, %v472
    %v597 = vpack.c.b16 %v477, %v475
    %v598 = vpack.c.b16 %v478, %v476
    %v599 = vpack.c.b16 %v481, %v479
    %v600 = vpack.c.b16 %v482, %v480
    %v601 = vpack.c.b16 %v485, %v483
    %v602 = vpack.c.b16 %v486, %v484
    %v603 = vpack.c.b16 %v489, %v487
    %v604 = vpack.c.b16 %v490, %v488
    %v605 = vpack.c.b16 %v493, %v491
    %v606 = vpack.c.b16 %v494, %v492
    %v607 = vpack.c.b16 %v497, %v495
    %v608 = vpack.c.b16 %v498, %v496
    %v609 = vpack.c.b16 %v501, %v499
    %v610 = vpack.c.b16 %v502, %v500
    %v611 = vpack.c.b16 %v505, %v503
    %v612 = vpack.c.b16 %v506, %v504
    %v613 = vpack.c.b16 %v509, %v507
    %v614 = vpack.c.b16 %v510, %v508
    %v615 = vpack.c.b16 %v513, %v511
    %v616 = vpack.c.b16 %v514, %v512
    %v617 = vpack.c.b16 %v517, %v515
    %v618 = vpack.c.b16 %v518, %v516
    %v619 = vpack.c.b16 %v521, %v519
    %v620 = vpack.c.b16 %v522, %v520
    %vm719 = vcmask 130048
    %v721 = vsel %vm719, %v117, 0
    %v724 = vsel %vm719, %v124, 0
    %726 = vmatpush.bf16.msra.mxu0 %v537
    %727 = vmatpush.bf16.msra.mxu0 %v535
    %728 = vmatpush.bf16.msra.mxu0 %v533
    %729 = vmatpush.bf16.msra.mxu0 %v531
    %730 = vmatpush.bf16.msra.mxu0 %v529
    %731 = vmatpush.bf16.msra.mxu0 %v527
    %732 = vmatpush.bf16.msra.mxu0 %v525
    %733 = vmatpush.bf16.msra.mxu0 %v523
    %734 = vmatmul.bf16.gmra.mxu0 %v111
    %v735 = vpop.f32.mrf.mxu0
    %v736 = vadd.f32 %v225, %v735
    %v737 = vpop.f32.mrf.mxu0
    %v738 = vadd.f32 %v225, %v737
    %739 = vmatmul.bf16.gmra.mxu0 %v118
    %v740 = vpop.f32.mrf.mxu0
    %v741 = vadd.f32 %v225, %v740
    %v742 = vpop.f32.mrf.mxu0
    %v743 = vadd.f32 %v225, %v742
    %744 = vdwg.mxu0
    %745 = vmatpush.bf16.msra.mxu0 %v553
    %746 = vmatpush.bf16.msra.mxu0 %v551
    %747 = vmatpush.bf16.msra.mxu0 %v549
    %748 = vmatpush.bf16.msra.mxu0 %v547
    %749 = vmatpush.bf16.msra.mxu0 %v545
    %750 = vmatpush.bf16.msra.mxu0 %v543
    %751 = vmatpush.bf16.msra.mxu0 %v541
    %752 = vmatpush.bf16.msra.mxu0 %v539
    %753 = vmatmul.bf16.gmra.mxu0 %v112
    %v754 = vpop.f32.mrf.mxu0
    %v755 = vadd.f32 %v736, %v754
    %v756 = vpop.f32.mrf.mxu0
    %v757 = vadd.f32 %v738, %v756
    %758 = vmatmul.bf16.gmra.mxu0 %v119
    %v759 = vpop.f32.mrf.mxu0
    %v760 = vadd.f32 %v741, %v759
    %v761 = vpop.f32.mrf.mxu0
    %v762 = vadd.f32 %v743, %v761
    %763 = vdwg.mxu0
    %764 = vmatpush.bf16.msra.mxu0 %v569
    %765 = vmatpush.bf16.msra.mxu0 %v567
    %766 = vmatpush.bf16.msra.mxu0 %v565
    %767 = vmatpush.bf16.msra.mxu0 %v563
    %768 = vmatpush.bf16.msra.mxu0 %v561
    %769 = vmatpush.bf16.msra.mxu0 %v559
    %770 = vmatpush.bf16.msra.mxu0 %v557
    %771 = vmatpush.bf16.msra.mxu0 %v555
    %772 = vmatmul.bf16.gmra.mxu0 %v113
    %v773 = vpop.f32.mrf.mxu0
    %v774 = vadd.f32 %v755, %v773
    %v775 = vpop.f32.mrf.mxu0
    %v776 = vadd.f32 %v757, %v775
    %777 = vmatmul.bf16.gmra.mxu0 %v120
    %v778 = vpop.f32.mrf.mxu0
    %v779 = vadd.f32 %v760, %v778
    %v780 = vpop.f32.mrf.mxu0
    %v781 = vadd.f32 %v762, %v780
    %782 = vdwg.mxu0
    %783 = vmatpush.bf16.msra.mxu0 %v585
    %784 = vmatpush.bf16.msra.mxu0 %v583
    %785 = vmatpush.bf16.msra.mxu0 %v581
    %786 = vmatpush.bf16.msra.mxu0 %v579
    %787 = vmatpush.bf16.msra.mxu0 %v577
    %788 = vmatpush.bf16.msra.mxu0 %v575
    %789 = vmatpush.bf16.msra.mxu0 %v573
    %790 = vmatpush.bf16.msra.mxu0 %v571
    %791 = vmatmul.bf16.gmra.mxu0 %v114
    %v792 = vpop.f32.mrf.mxu0
    %v793 = vadd.f32 %v774, %v792
    %v794 = vpop.f32.mrf.mxu0
    %v795 = vadd.f32 %v776, %v794
    %796 = vmatmul.bf16.gmra.mxu0 %v121
    %v797 = vpop.f32.mrf.mxu0
    %v798 = vadd.f32 %v779, %v797
    %v799 = vpop.f32.mrf.mxu0
    %v800 = vadd.f32 %v781, %v799
    %801 = vdwg.mxu0
    %802 = vmatpush.bf16.msra.mxu0 %v601
    %803 = vmatpush.bf16.msra.mxu0 %v599
    %804 = vmatpush.bf16.msra.mxu0 %v597
    %805 = vmatpush.bf16.msra.mxu0 %v595
    %806 = vmatpush.bf16.msra.mxu0 %v593
    %807 = vmatpush.bf16.msra.mxu0 %v591
    %808 = vmatpush.bf16.msra.mxu0 %v589
    %809 = vmatpush.bf16.msra.mxu0 %v587
    %810 = vmatmul.bf16.gmra.mxu0 %v115
    %v811 = vpop.f32.mrf.mxu0
    %v812 = vadd.f32 %v793, %v811
    %v813 = vpop.f32.mrf.mxu0
    %v814 = vadd.f32 %v795, %v813
    %815 = vmatmul.bf16.gmra.mxu0 %v122
    %v816 = vpop.f32.mrf.mxu0
    %v817 = vadd.f32 %v798, %v816
    %v818 = vpop.f32.mrf.mxu0
    %v819 = vadd.f32 %v800, %v818
    %820 = vdwg.mxu0
    %821 = vmatpush.bf16.msra.mxu0 %v617
    %822 = vmatpush.bf16.msra.mxu0 %v615
    %823 = vmatpush.bf16.msra.mxu0 %v613
    %824 = vmatpush.bf16.msra.mxu0 %v611
    %825 = vmatpush.bf16.msra.mxu0 %v609
    %826 = vmatpush.bf16.msra.mxu0 %v607
    %827 = vmatpush.bf16.msra.mxu0 %v605
    %828 = vmatpush.bf16.msra.mxu0 %v603
    %829 = vmatmul.bf16.gmra.mxu0 %v116
    %v830 = vpop.f32.mrf.mxu0
    %v831 = vadd.f32 %v812, %v830
    %v832 = vpop.f32.mrf.mxu0
    %v833 = vadd.f32 %v814, %v832
    %834 = vmatmul.bf16.gmra.mxu0 %v123
    %v835 = vpop.f32.mrf.mxu0
    %v836 = vadd.f32 %v817, %v835
    %v837 = vpop.f32.mrf.mxu0
    %v838 = vadd.f32 %v819, %v837
    %839 = vdwg.mxu0
    %840 = vmatpush.bf16.msra.mxu0 0
    %841 = vmatpush.bf16.msra.mxu0 0
    %842 = vmatpush.bf16.msra.mxu0 0
    %843 = vmatpush.bf16.msra.mxu0 0
    %844 = vmatpush.bf16.msra.mxu0 0
    %845 = vmatpush.bf16.msra.mxu0 0
    %846 = vmatpush.bf16.msra.mxu0 0
    %847 = vmatpush.bf16.msra.mxu0 %v619
    %848 = vmatmul.bf16.gmra.mxu0 %v721
    %v849 = vpop.f32.mrf.mxu0
    %v850 = vadd.f32 %v831, %v849
    %v851 = vpop.f32.mrf.mxu0
    %v852 = vadd.f32 %v833, %v851
    %853 = vmatmul.bf16.gmra.mxu0 %v724
    %v854 = vpop.f32.mrf.mxu0
    %v855 = vadd.f32 %v836, %v854
    %v856 = vpop.f32.mrf.mxu0
    %v857 = vadd.f32 %v838, %v856
    %858 = vdwg.mxu0
    %859 = vmatpush.bf16.msra.mxu0 %v538
    %860 = vmatpush.bf16.msra.mxu0 %v536
    %861 = vmatpush.bf16.msra.mxu0 %v534
    %862 = vmatpush.bf16.msra.mxu0 %v532
    %863 = vmatpush.bf16.msra.mxu0 %v530
    %864 = vmatpush.bf16.msra.mxu0 %v528
    %865 = vmatpush.bf16.msra.mxu0 %v526
    %866 = vmatpush.bf16.msra.mxu0 %v524
    %867 = vmatmul.bf16.gmra.mxu0 %v111
    %v868 = vpop.f32.mrf.mxu0
    %v869 = vadd.f32 %v226, %v868
    %v870 = vpop.f32.mrf.mxu0
    %v871 = vadd.f32 %v226, %v870
    %872 = vmatmul.bf16.gmra.mxu0 %v118
    %v873 = vpop.f32.mrf.mxu0
    %v874 = vadd.f32 %v226, %v873
    %v875 = vpop.f32.mrf.mxu0
    %v876 = vadd.f32 %v226, %v875
    %877 = vdwg.mxu0
    %878 = vmatpush.bf16.msra.mxu0 %v554
    %879 = vmatpush.bf16.msra.mxu0 %v552
    %880 = vmatpush.bf16.msra.mxu0 %v550
    %881 = vmatpush.bf16.msra.mxu0 %v548
    %882 = vmatpush.bf16.msra.mxu0 %v546
    %883 = vmatpush.bf16.msra.mxu0 %v544
    %884 = vmatpush.bf16.msra.mxu0 %v542
    %885 = vmatpush.bf16.msra.mxu0 %v540
    %886 = vmatmul.bf16.gmra.mxu0 %v112
    %v887 = vpop.f32.mrf.mxu0
    %v888 = vadd.f32 %v869, %v887
    %v889 = vpop.f32.mrf.mxu0
    %v890 = vadd.f32 %v871, %v889
    %891 = vmatmul.bf16.gmra.mxu0 %v119
    %v892 = vpop.f32.mrf.mxu0
    %v893 = vadd.f32 %v874, %v892
    %v894 = vpop.f32.mrf.mxu0
    %v895 = vadd.f32 %v876, %v894
    %896 = vdwg.mxu0
    %897 = vmatpush.bf16.msra.mxu0 %v570
    %898 = vmatpush.bf16.msra.mxu0 %v568
    %899 = vmatpush.bf16.msra.mxu0 %v566
    %900 = vmatpush.bf16.msra.mxu0 %v564
    %901 = vmatpush.bf16.msra.mxu0 %v562
    %902 = vmatpush.bf16.msra.mxu0 %v560
    %903 = vmatpush.bf16.msra.mxu0 %v558
    %904 = vmatpush.bf16.msra.mxu0 %v556
    %905 = vmatmul.bf16.gmra.mxu0 %v113
    %v906 = vpop.f32.mrf.mxu0
    %v907 = vadd.f32 %v888, %v906
    %v908 = vpop.f32.mrf.mxu0
    %v909 = vadd.f32 %v890, %v908
    %910 = vmatmul.bf16.gmra.mxu0 %v120
    %v911 = vpop.f32.mrf.mxu0
    %v912 = vadd.f32 %v893, %v911
    %v913 = vpop.f32.mrf.mxu0
    %v914 = vadd.f32 %v895, %v913
    %915 = vdwg.mxu0
    %916 = vmatpush.bf16.msra.mxu0 %v586
    %917 = vmatpush.bf16.msra.mxu0 %v584
    %918 = vmatpush.bf16.msra.mxu0 %v582
    %919 = vmatpush.bf16.msra.mxu0 %v580
    %920 = vmatpush.bf16.msra.mxu0 %v578
    %921 = vmatpush.bf16.msra.mxu0 %v576
    %922 = vmatpush.bf16.msra.mxu0 %v574
    %923 = vmatpush.bf16.msra.mxu0 %v572
    %924 = vmatmul.bf16.gmra.mxu0 %v114
    %v925 = vpop.f32.mrf.mxu0
    %v926 = vadd.f32 %v907, %v925
    %v927 = vpop.f32.mrf.mxu0
    %v928 = vadd.f32 %v909, %v927
    %929 = vmatmul.bf16.gmra.mxu0 %v121
    %v930 = vpop.f32.mrf.mxu0
    %v931 = vadd.f32 %v912, %v930
    %v932 = vpop.f32.mrf.mxu0
    %v933 = vadd.f32 %v914, %v932
    %934 = vdwg.mxu0
    %935 = vmatpush.bf16.msra.mxu0 %v602
    %936 = vmatpush.bf16.msra.mxu0 %v600
    %937 = vmatpush.bf16.msra.mxu0 %v598
    %938 = vmatpush.bf16.msra.mxu0 %v596
    %939 = vmatpush.bf16.msra.mxu0 %v594
    %940 = vmatpush.bf16.msra.mxu0 %v592
    %941 = vmatpush.bf16.msra.mxu0 %v590
    %942 = vmatpush.bf16.msra.mxu0 %v588
    %943 = vmatmul.bf16.gmra.mxu0 %v115
    %v944 = vpop.f32.mrf.mxu0
    %v945 = vadd.f32 %v926, %v944
    %v946 = vpop.f32.mrf.mxu0
    %v947 = vadd.f32 %v928, %v946
    %948 = vmatmul.bf16.gmra.mxu0 %v122
    %v949 = vpop.f32.mrf.mxu0
    %v950 = vadd.f32 %v931, %v949
    %v951 = vpop.f32.mrf.mxu0
    %v952 = vadd.f32 %v933, %v951
    %953 = vdwg.mxu0
    %954 = vmatpush.bf16.msra.mxu0 %v618
    %955 = vmatpush.bf16.msra.mxu0 %v616
    %956 = vmatpush.bf16.msra.mxu0 %v614
    %957 = vmatpush.bf16.msra.mxu0 %v612
    %958 = vmatpush.bf16.msra.mxu0 %v610
    %959 = vmatpush.bf16.msra.mxu0 %v608
    %960 = vmatpush.bf16.msra.mxu0 %v606
    %961 = vmatpush.bf16.msra.mxu0 %v604
    %962 = vmatmul.bf16.gmra.mxu0 %v116
    %v963 = vpop.f32.mrf.mxu0
    %v964 = vadd.f32 %v945, %v963
    %v965 = vpop.f32.mrf.mxu0
    %v966 = vadd.f32 %v947, %v965
    %967 = vmatmul.bf16.gmra.mxu0 %v123
    %v968 = vpop.f32.mrf.mxu0
    %v969 = vadd.f32 %v950, %v968
    %v970 = vpop.f32.mrf.mxu0
    %v971 = vadd.f32 %v952, %v970
    %972 = vdwg.mxu0
    %973 = vmatpush.bf16.msra.mxu0 0
    %974 = vmatpush.bf16.msra.mxu0 0
    %975 = vmatpush.bf16.msra.mxu0 0
    %976 = vmatpush.bf16.msra.mxu0 0
    %977 = vmatpush.bf16.msra.mxu0 0
    %978 = vmatpush.bf16.msra.mxu0 0
    %979 = vmatpush.bf16.msra.mxu0 0
    %980 = vmatpush.bf16.msra.mxu0 %v620
    %981 = vmatmul.bf16.gmra.mxu0 %v721
    %v982 = vpop.f32.mrf.mxu0
    %v983 = vadd.f32 %v964, %v982
    %v984 = vpop.f32.mrf.mxu0
    %v985 = vadd.f32 %v966, %v984
    %986 = vmatmul.bf16.gmra.mxu0 %v724
    %v987 = vpop.f32.mrf.mxu0
    %v988 = vadd.f32 %v969, %v987
    %v989 = vpop.f32.mrf.mxu0
    %v990 = vadd.f32 %v971, %v989
    %991 = vdwg.mxu0
    %v992 = vmax.f32 %v850, 0.0
    %v993 = vmax.f32 %v983, 0.0
    %v994 = vmax.f32 %v852, 0.0
    %v995 = vmax.f32 %v985, 0.0
    %v996 = vmax.f32 %v855, 0.0
    %v997 = vmax.f32 %v988, 0.0
    %v998 = vmax.f32 %v857, 0.0
    %v999 = vmax.f32 %v990, 0.0
    %v1000 = vpack.c.bf16 %v994, %v992
    %v1001 = vpack.c.bf16 %v995, %v993
    %v1002 = vpack.c.bf16 %v998, %v996
    %v1003 = vpack.c.bf16 %v999, %v997
    %v1004 = vld [vmem:[#allocation8] sm:$0xf]
    %v1005 = vld [vmem:[#allocation8 + $0x4] sm:$0xf]
    %v1006 = vld [vmem:[#allocation8 + $0x8] sm:$0xf]
    %v1007 = vld [vmem:[#allocation8 + $0xc] sm:$0xf]
    %v1008 = vld [vmem:[#allocation8 + $0x10] sm:$0xf]
    %v1009 = vld [vmem:[#allocation8 + $0x14] sm:$0xf]
    %v1010 = vld [vmem:[#allocation8 + $0x18] sm:$0xf]
    %v1011 = vld [vmem:[#allocation8 + $0x1c] sm:$0xf]
    %v1012 = vld [vmem:[#allocation8 + $0x20] sm:$0xf]
    %v1013 = vld [vmem:[#allocation8 + $0x24] sm:$0xf]
    %v1014 = vld [vmem:[#allocation8 + $0x28] sm:$0xf]
    %v1015 = vld [vmem:[#allocation8 + $0x2c] sm:$0xf]
    %v1016 = vld [vmem:[#allocation8 + $0x30] sm:$0xf]
    %v1017 = vld [vmem:[#allocation8 + $0x34] sm:$0xf]
    %v1018 = vld [vmem:[#allocation8 + $0x38] sm:$0xf]
    %v1019 = vld [vmem:[#allocation8 + $0x3c] sm:$0xf]
    %v1020 = vld [vmem:[#allocation8 + $0x40] sm:$0xf]
    %v1021 = vld [vmem:[#allocation8 + $0x44] sm:$0xf]
    %v1022 = vld [vmem:[#allocation8 + $0x48] sm:$0xf]
    %v1023 = vld [vmem:[#allocation8 + $0x4c] sm:$0xf]
    %v1024 = vld [vmem:[#allocation8 + $0x50] sm:$0xf]
    %v1025 = vld [vmem:[#allocation8 + $0x54] sm:$0xf]
    %v1026 = vld [vmem:[#allocation8 + $0x58] sm:$0xf]
    %v1027 = vld [vmem:[#allocation8 + $0x5c] sm:$0xf]
    %v1028 = vld [vmem:[#allocation8 + $0x60] sm:$0xf]
    %v1029 = vld [vmem:[#allocation8 + $0x64] sm:$0xf]
    %v1030 = vld [vmem:[#allocation8 + $0x68] sm:$0xf]
    %v1031 = vld [vmem:[#allocation8 + $0x6c] sm:$0xf]
    %v1032 = vld [vmem:[#allocation8 + $0x70] sm:$0xf]
    %v1033 = vld [vmem:[#allocation8 + $0x74] sm:$0xf]
    %v1034 = vld [vmem:[#allocation8 + $0x78] sm:$0xf]
    %v1035 = vld [vmem:[#allocation8 + $0x7c] sm:$0xf]
    %v1036 = vld [vmem:[%s4] sm:$0x1]
    %v1038 = vperm.slane %v1036, 0
    %v1072 = vunpack.c.l.b16 %v1004
    %v1073 = vunpack.c.l.b16 %v1005
    %v1074 = vunpack.c.l.b16 %v1006
    %v1075 = vunpack.c.l.b16 %v1007
    %v1076 = vunpack.c.l.b16 %v1008
    %v1077 = vunpack.c.l.b16 %v1009
    %v1078 = vunpack.c.l.b16 %v1010
    %v1079 = vunpack.c.l.b16 %v1011
    %v1080 = vunpack.c.l.b16 %v1012
    %v1081 = vunpack.c.l.b16 %v1013
    %v1082 = vunpack.c.l.b16 %v1014
    %v1083 = vunpack.c.l.b16 %v1015
    %v1084 = vunpack.c.l.b16 %v1016
    %v1085 = vunpack.c.l.b16 %v1017
    %v1086 = vunpack.c.l.b16 %v1018
    %v1087 = vunpack.c.l.b16 %v1019
    %v1088 = vunpack.c.l.b16 %v1020
    %v1089 = vunpack.c.l.b16 %v1021
    %v1090 = vunpack.c.l.b16 %v1022
    %v1091 = vunpack.c.l.b16 %v1023
    %v1092 = vunpack.c.l.b16 %v1024
    %v1093 = vunpack.c.l.b16 %v1025
    %v1094 = vunpack.c.l.b16 %v1026
    %v1095 = vunpack.c.l.b16 %v1027
    %v1096 = vunpack.c.l.b16 %v1028
    %v1097 = vunpack.c.l.b16 %v1029
    %v1098 = vunpack.c.l.b16 %v1030
    %v1099 = vunpack.c.l.b16 %v1031
    %v1100 = vunpack.c.l.b16 %v1032
    %v1101 = vunpack.c.l.b16 %v1033
    %v1102 = vunpack.c.l.b16 %v1034
    %v1103 = vunpack.c.l.b16 %v1035
    %v1104 = vpack.c.b16 %v1073, %v1072
    %v1105 = vpack.c.b16 %v1075, %v1074
    %v1106 = vpack.c.b16 %v1077, %v1076
    %v1107 = vpack.c.b16 %v1079, %v1078
    %v1108 = vpack.c.b16 %v1081, %v1080
    %v1109 = vpack.c.b16 %v1083, %v1082
    %v1110 = vpack.c.b16 %v1085, %v1084
    %v1111 = vpack.c.b16 %v1087, %v1086
    %v1112 = vpack.c.b16 %v1089, %v1088
    %v1113 = vpack.c.b16 %v1091, %v1090
    %v1114 = vpack.c.b16 %v1093, %v1092
    %v1115 = vpack.c.b16 %v1095, %v1094
    %v1116 = vpack.c.b16 %v1097, %v1096
    %v1117 = vpack.c.b16 %v1099, %v1098
    %v1118 = vpack.c.b16 %v1101, %v1100
    %v1119 = vpack.c.b16 %v1103, %v1102
    %1136 = vmatpush.bf16.msra.mxu0 %v1111
    %1137 = vmatpush.bf16.msra.mxu0 %v1110
    %1138 = vmatpush.bf16.msra.mxu0 %v1109
    %1139 = vmatpush.bf16.msra.mxu0 %v1108
    %1140 = vmatpush.bf16.msra.mxu0 %v1107
    %1141 = vmatpush.bf16.msra.mxu0 %v1106
    %1142 = vmatpush.bf16.msra.mxu0 %v1105
    %1143 = vmatpush.bf16.msra.mxu0 %v1104
    %1144 = vmatmul.bf16.gmra.mxu0 %v1000
    %v1145 = vpop.f32.mrf.mxu0
    %v1146 = vadd.f32 %v1038, %v1145
    %v1147 = vpop.f32.mrf.mxu0
    %v1148 = vadd.f32 %v1038, %v1147
    %1149 = vmatmul.bf16.gmra.mxu0 %v1002
    %v1150 = vpop.f32.mrf.mxu0
    %v1151 = vadd.f32 %v1038, %v1150
    %v1152 = vpop.f32.mrf.mxu0
    %v1153 = vadd.f32 %v1038, %v1152
    %1154 = vdwg.mxu0
    %1155 = vmatpush.bf16.msra.mxu0 %v1119
    %1156 = vmatpush.bf16.msra.mxu0 %v1118
    %1157 = vmatpush.bf16.msra.mxu0 %v1117
    %1158 = vmatpush.bf16.msra.mxu0 %v1116
    %1159 = vmatpush.bf16.msra.mxu0 %v1115
    %1160 = vmatpush.bf16.msra.mxu0 %v1114
    %1161 = vmatpush.bf16.msra.mxu0 %v1113
    %1162 = vmatpush.bf16.msra.mxu0 %v1112
    %1163 = vmatmul.bf16.gmra.mxu0 %v1001
    %v1164 = vpop.f32.mrf.mxu0
    %v1165 = vadd.f32 %v1146, %v1164
    %v1166 = vpop.f32.mrf.mxu0
    %v1167 = vadd.f32 %v1148, %v1166
    %1168 = vmatmul.bf16.gmra.mxu0 %v1003
    %v1169 = vpop.f32.mrf.mxu0
    %v1170 = vadd.f32 %v1151, %v1169
    %v1171 = vpop.f32.mrf.mxu0
    %v1172 = vadd.f32 %v1153, %v1171
    %1173 = vdwg.mxu0
    %v1174 = vpack.c.bf16 %v1165, %v1165
    %v1175 = vpack.c.bf16 %v1167, %v1167
    %v1176 = vpack.c.bf16 %v1170, %v1170
    %v1177 = vpack.c.bf16 %v1172, %v1172
    %1178 = vst [vmem:[#allocation10] sm:$0xf] %v1174
    %1179 = vst [vmem:[#allocation10 + $0x4] sm:$0xf] %v1175
    %1180 = vst [vmem:[#allocation10 + $0x8] sm:$0xf] %v1176
    %1181 = vst [vmem:[#allocation10 + $0xc] sm:$0xf] %v1177
    // Predicated region
    $region38: #{tpu_custom_call.1} parent=1 // pred_check
      _
    $region39: #{tpu_custom_call.1} parent=1 // pred_check_branch
      %1183 = sbr.rel (0) target = $region41
    $region40: #{tpu_custom_call.1} parent=1 // pred_region
      %1185 = vsyncadd [#allocation4], 0
      %s1186 = sshll.u32 [#allocation10], 4
      %s1187 = int_to_ptr.vmem [resolvable:$true] %s1186
      %s1188 = sshll.u32 %s5, 4
      %s1189 = int_to_ptr.hbm [resolvable:$true] %s1188
      %1194 = dma.vmem_to_hbm [thread:$0]  %s1187, 256, %s1189, [#allocation4], 64, 64, 4
    $region41: #{tpu_custom_call.1} parent=1 // pred_fallthru
      _
    // Predicated region
    $region42: #{tpu_custom_call.1} parent=1 // pred_check
      _
    $region43: #{tpu_custom_call.1} parent=1 // pred_check_branch
      %1196 = sbr.rel (0) target = $region45
    $region44: #{tpu_custom_call.1} parent=1 // pred_region
      %1198 = dma.done [#allocation4], 256
    $region45: #{tpu_custom_call.1} parent=1 // pred_fallthru
      _
    %1199 = vsyncpa [#allocation3], 1
    %1200 = vsyncpa [#allocation6], 1
    %1201 = vsyncpa [#allocation9], 1
    %1202 = vsyncpa [#allocation4], 1

</llo_original>
